<compile_context>
chip_gen: v6e
topology: v6e:2x2x1
jax: 0.10.0
libtpu: 0.0.40
codegen_flags: <defaults>
</compile_context>

<pallas_src>
import jax
import jax.numpy as jnp
from jax.experimental import pallas as pl
from jax.experimental.pallas import tpu as pltpu


def _lstm_kernel(x_ref, wih_ref, b_ref, whh_ref, h0_ref, c0_ref, out_ref):
    B, H = h0_ref.shape
    TB = x_ref.shape[0]
    T = TB // B
    G = 4 * H

    # ---- gate-lane constants (hoisted; avoids per-iteration broadcasts) ----
    # gate order i, f, g, o; i/f/o use sigmoid, g uses tanh.
    # sigmoid(x) = 0.5 * tanh(0.5 * x) + 0.5 -> one tanh covers all 4 gates.
    lane_r = jax.lax.broadcasted_iota(jnp.int32, (1, G), 1)
    is_g_r = (lane_r >= 2 * H) & (lane_r < 3 * H)
    pre_scale_row = jnp.where(is_g_r, 1.0, 0.5).astype(jnp.float32)   # (1, G)

    lane_b = jax.lax.broadcasted_iota(jnp.int32, (B, G), 1)
    is_g_b = (lane_b >= 2 * H) & (lane_b < 3 * H)
    post_mul = jnp.where(is_g_b, 1.0, 0.5).astype(jnp.float32)        # (B, G)
    post_add = jnp.where(is_g_b, 0.0, 0.5).astype(jnp.float32)        # (B, G)

    # ---- hoisted, time-parallel input projection (only MXU use) ----
    # x rows are time-major (t*B + b), so each step's slab is a static
    # 2-row pick that does not depend on the recurrence (off the chain).
    xw = jnp.dot(x_ref[...], wih_ref[...], preferred_element_type=jnp.float32)
    xw = (xw + b_ref[...]) * pre_scale_row                            # (T*B, G)
    x_slab = [xw[t * B:(t + 1) * B, :] for t in range(T)]

    # fused recurrent weights: pre-scaled per gate and pre-broadcast (hoisted)
    whh_s = whh_ref[...] * pre_scale_row                              # (H, G)
    w_row = [jnp.broadcast_to(whh_s[k:k + 1, :], (B, G)) for k in range(H)]

    h = h0_ref[...]                           # (B, H) — one vreg, stays in vregs
    c = c0_ref[...]                           # (B, H)

    hs = []
    # static, fully unrolled recurrence (T is small & compile-time)
    for t in range(T):
        # fused recurrent projection: 2 lane-broadcast muls + 1 add (H = 2)
        acc = h[:, 0:1] * w_row[0]
        for k in range(1, H):
            acc = acc + h[:, k:k + 1] * w_row[k]
        pre = acc + x_slab[t]                 # fused, pre-scaled gate slab (B, G)
        tz = jnp.tanh(pre)                    # one EUP push for all 4 gates
        gz = tz * post_mul + post_add         # i,f,o -> sigmoid(.), g -> tanh(.)
        i_g = gz[:, 0 * H:1 * H]
        f_g = gz[:, 1 * H:2 * H]
        g_g = gz[:, 2 * H:3 * H]
        o_g = gz[:, 3 * H:4 * H]
        c = f_g * c + i_g * g_g
        h = o_g * jnp.tanh(c)                 # second (and last) EUP push
        hs.append(h)

    # single lane-dense store of the whole sequence: (B, T*H)
    out_ref[...] = jnp.concatenate(hs, axis=1).astype(out_ref.dtype)


def lstm_forward_pallas(x_btd, w_ih, w_hh, b_ih, b_hh, h0, c0):
    """x_btd: (B, T, D) batch_first input (like PyTorch). Returns (B, T, H)."""
    B, T, D = x_btd.shape
    H = h0.shape[-1]

    # tiny wrapper-side transpose: time-major rows so each step's gate slab is
    # a contiguous 2-row pick inside the kernel.
    x2d = jnp.transpose(jnp.asarray(x_btd, jnp.float32),
                        (1, 0, 2)).reshape(T * B, D)                   # (T*B, D)
    wih_t = jnp.asarray(w_ih, jnp.float32).T                           # (D, 4H)
    whh_t = jnp.asarray(w_hh, jnp.float32).T                           # (H, 4H)
    bias = (jnp.asarray(b_ih, jnp.float32)
            + jnp.asarray(b_hh, jnp.float32)).reshape(1, 4 * H)        # (1, 4H)
    h0_2 = jnp.asarray(h0, jnp.float32).reshape(B, H)
    c0_2 = jnp.asarray(c0, jnp.float32).reshape(B, H)

    # Single kernel invocation (no grid): all operands are tiny, so every
    # array is one full VMEM block — one DMA in / one DMA out, no pipelining.
    out2d = pl.pallas_call(
        _lstm_kernel,
        out_shape=jax.ShapeDtypeStruct((B, T * H), jnp.float32),
        in_specs=[pl.BlockSpec(memory_space=pltpu.MemorySpace.VMEM)] * 6,
        out_specs=pl.BlockSpec(memory_space=pltpu.MemorySpace.VMEM),
    )(x2d, wih_t, bias, whh_t, h0_2, c0_2)

    # free reshape: (B, T*H) row-major == (B, T, H) row-major
    return out2d.reshape(B, T, H)


def lstm_forward_ref(x_btd, w_ih, w_hh, b_ih, b_hh, h0, c0):
    """Pure-JAX reference (lax.scan) for correctness checking."""
    H = h0.shape[-1]
    bias = b_ih + b_hh

    def step(carry, x_t):
        h, c = carry
        gates = x_t @ w_ih.T + h @ w_hh.T + bias
        i = jax.nn.sigmoid(gates[:, 0 * H:1 * H])
        f = jax.nn.sigmoid(gates[:, 1 * H:2 * H])
        g = jnp.tanh(gates[:, 2 * H:3 * H])
        o = jax.nn.sigmoid(gates[:, 3 * H:4 * H])
        c = f * c + i * g
        h = o * jnp.tanh(c)
        return (h, c), h

    x_tbd = jnp.transpose(x_btd, (1, 0, 2))
    _, hs = jax.lax.scan(step, (h0, c0), x_tbd)
    return jnp.transpose(hs, (1, 0, 2))


if __name__ == "__main__":
    # module hyperparameters
    INPUT_SIZE, HIDDEN_SIZE = 12, 2
    B, T = 2, 8

    key = jax.random.PRNGKey(0)
    kx, kwi, kwh, kbi, kbh, kh0, kc0 = jax.random.split(key, 7)

    # deterministic parameter init (PyTorch default: U(-1/sqrt(H), 1/sqrt(H)))
    bound = 1.0 / (HIDDEN_SIZE ** 0.5)
    w_ih = jax.random.uniform(kwi, (4 * HIDDEN_SIZE, INPUT_SIZE),
                              minval=-bound, maxval=bound, dtype=jnp.float32)
    w_hh = jax.random.uniform(kwh, (4 * HIDDEN_SIZE, HIDDEN_SIZE),
                              minval=-bound, maxval=bound, dtype=jnp.float32)
    b_ih = jax.random.uniform(kbi, (4 * HIDDEN_SIZE,),
                              minval=-bound, maxval=bound, dtype=jnp.float32)
    b_hh = jax.random.uniform(kbh, (4 * HIDDEN_SIZE,),
                              minval=-bound, maxval=bound, dtype=jnp.float32)

    # TODO(synk): torch.randn in forward() is nondeterministic across runs;
    # reproduced with a fixed jax.random normal draw instead.
    h0 = jax.random.normal(kh0, (B, HIDDEN_SIZE), dtype=jnp.float32)
    c0 = jax.random.normal(kc0, (B, HIDDEN_SIZE), dtype=jnp.float32)

    x = jax.random.normal(kx, (B, T, INPUT_SIZE), dtype=jnp.float32)

    out = jax.jit(lstm_forward_pallas)(x, w_ih, w_hh, b_ih, b_hh, h0, c0)
    out = jax.block_until_ready(out)

    ref = lstm_forward_ref(x, w_ih, w_hh, b_ih, b_hh, h0, c0)
    assert out.shape == (B, T, HIDDEN_SIZE)
    assert jnp.allclose(out, ref, atol=1e-5, rtol=1e-5)

    print("KERNEL_OK")
</pallas_src>

<mosaic_0001>
module attributes {stable_mosaic.version = 11 : i64} {
  func.func @_lstm_kernel(%arg0: memref<16x12xf32, #tpu.memory_space<vmem>>, %arg1: memref<12x8xf32, #tpu.memory_space<vmem>>, %arg2: memref<1x8xf32, #tpu.memory_space<vmem>>, %arg3: memref<2x8xf32, #tpu.memory_space<vmem>>, %arg4: memref<2x2xf32, #tpu.memory_space<vmem>>, %arg5: memref<2x2xf32, #tpu.memory_space<vmem>>, %arg6: memref<2x16xf32, #tpu.memory_space<vmem>>) attributes {dimension_semantics = [], scalar_prefetch = 0 : i64, scratch_operands = 0 : i64, tpu.core_type = #tpu.core_type<tc>} {
    %0 = tpu.iota {dimensions = array<i32: 1>} : vector<1x8xi32>
    %c4_i32 = arith.constant 4 : i32
    %1 = vector.broadcast %c4_i32 : i32 to vector<1x8xi32>
    %2 = arith.cmpi sge, %0, %1 : vector<1x8xi32>
    %c6_i32 = arith.constant 6 : i32
    %3 = vector.broadcast %c6_i32 : i32 to vector<1x8xi32>
    %4 = arith.cmpi slt, %0, %3 : vector<1x8xi32>
    %5 = arith.andi %2, %4 : vector<1x8xi1>
    %cst = arith.constant 1.000000e+00 : f32
    %cst_0 = arith.constant 5.000000e-01 : f32
    %6 = vector.broadcast %cst : f32 to vector<1x8xf32>
    %7 = vector.broadcast %cst_0 : f32 to vector<1x8xf32>
    %8 = arith.select %5, %6, %7 : vector<1x8xi1>, vector<1x8xf32>
    %9 = tpu.iota {dimensions = array<i32: 1>} : vector<2x8xi32>
    %c4_i32_1 = arith.constant 4 : i32
    %10 = vector.broadcast %c4_i32_1 : i32 to vector<2x8xi32>
    %11 = arith.cmpi sge, %9, %10 : vector<2x8xi32>
    %c6_i32_2 = arith.constant 6 : i32
    %12 = vector.broadcast %c6_i32_2 : i32 to vector<2x8xi32>
    %13 = arith.cmpi slt, %9, %12 : vector<2x8xi32>
    %14 = arith.andi %11, %13 : vector<2x8xi1>
    %cst_3 = arith.constant 1.000000e+00 : f32
    %cst_4 = arith.constant 5.000000e-01 : f32
    %15 = vector.broadcast %cst_3 : f32 to vector<2x8xf32>
    %16 = vector.broadcast %cst_4 : f32 to vector<2x8xf32>
    %17 = arith.select %14, %15, %16 : vector<2x8xi1>, vector<2x8xf32>
    %cst_5 = arith.constant 0.000000e+00 : f32
    %cst_6 = arith.constant 5.000000e-01 : f32
    %18 = vector.broadcast %cst_5 : f32 to vector<2x8xf32>
    %19 = vector.broadcast %cst_6 : f32 to vector<2x8xf32>
    %20 = arith.select %14, %18, %19 : vector<2x8xi1>, vector<2x8xf32>
    %c0 = arith.constant 0 : index
    %c0_7 = arith.constant 0 : index
    %21 = vector.load %arg0[%c0, %c0_7] : memref<16x12xf32, #tpu.memory_space<vmem>>, vector<16x12xf32>
    %c0_8 = arith.constant 0 : index
    %c0_9 = arith.constant 0 : index
    %22 = vector.load %arg1[%c0_8, %c0_9] : memref<12x8xf32, #tpu.memory_space<vmem>>, vector<12x8xf32>
    %cst_10 = arith.constant dense<0.000000e+00> : vector<16x8xf32>
    %23 = tpu.matmul %21, %22, %cst_10 {dimension_numbers = #tpu.dot_dimension_numbers<[1], [0], [0], [1], [0, 0, 1, 1], [], []>} : vector<16x12xf32>, vector<12x8xf32>, vector<16x8xf32> -> vector<16x8xf32>
    %c0_11 = arith.constant 0 : index
    %c0_12 = arith.constant 0 : index
    %24 = vector.load %arg2[%c0_11, %c0_12] : memref<1x8xf32, #tpu.memory_space<vmem>>, vector<1x8xf32>
    %25 = vector.broadcast %24 : vector<1x8xf32> to vector<16x8xf32>
    %26 = arith.addf %23, %25 : vector<16x8xf32>
    %27 = vector.broadcast %8 : vector<1x8xf32> to vector<16x8xf32>
    %28 = arith.mulf %26, %27 : vector<16x8xf32>
    %29 = vector.extract_strided_slice %28 {offsets = [0, 0], sizes = [2, 8], strides = [1, 1]} : vector<16x8xf32> to vector<2x8xf32>
    %30 = vector.extract_strided_slice %28 {offsets = [2, 0], sizes = [2, 8], strides = [1, 1]} : vector<16x8xf32> to vector<2x8xf32>
    %31 = vector.extract_strided_slice %28 {offsets = [4, 0], sizes = [2, 8], strides = [1, 1]} : vector<16x8xf32> to vector<2x8xf32>
    %32 = vector.extract_strided_slice %28 {offsets = [6, 0], sizes = [2, 8], strides = [1, 1]} : vector<16x8xf32> to vector<2x8xf32>
    %33 = vector.extract_strided_slice %28 {offsets = [8, 0], sizes = [2, 8], strides = [1, 1]} : vector<16x8xf32> to vector<2x8xf32>
    %34 = vector.extract_strided_slice %28 {offsets = [10, 0], sizes = [2, 8], strides = [1, 1]} : vector<16x8xf32> to vector<2x8xf32>
    %35 = vector.extract_strided_slice %28 {offsets = [12, 0], sizes = [2, 8], strides = [1, 1]} : vector<16x8xf32> to vector<2x8xf32>
    %36 = vector.extract_strided_slice %28 {offsets = [14, 0], sizes = [2, 8], strides = [1, 1]} : vector<16x8xf32> to vector<2x8xf32>
    %c0_13 = arith.constant 0 : index
    %c0_14 = arith.constant 0 : index
    %37 = vector.load %arg3[%c0_13, %c0_14] : memref<2x8xf32, #tpu.memory_space<vmem>>, vector<2x8xf32>
    %38 = vector.broadcast %8 : vector<1x8xf32> to vector<2x8xf32>
    %39 = arith.mulf %37, %38 : vector<2x8xf32>
    %40 = vector.extract_strided_slice %39 {offsets = [0, 0], sizes = [1, 8], strides = [1, 1]} : vector<2x8xf32> to vector<1x8xf32>
    %41 = vector.shape_cast %40 : vector<1x8xf32> to vector<1x8xf32>
    %42 = vector.broadcast %41 : vector<1x8xf32> to vector<2x8xf32>
    %43 = vector.extract_strided_slice %39 {offsets = [1, 0], sizes = [1, 8], strides = [1, 1]} : vector<2x8xf32> to vector<1x8xf32>
    %44 = vector.shape_cast %43 : vector<1x8xf32> to vector<1x8xf32>
    %45 = vector.broadcast %44 : vector<1x8xf32> to vector<2x8xf32>
    %c0_15 = arith.constant 0 : index
    %c0_16 = arith.constant 0 : index
    %46 = vector.load %arg4[%c0_15, %c0_16] : memref<2x2xf32, #tpu.memory_space<vmem>>, vector<2x2xf32>
    %c0_17 = arith.constant 0 : index
    %c0_18 = arith.constant 0 : index
    %47 = vector.load %arg5[%c0_17, %c0_18] : memref<2x2xf32, #tpu.memory_space<vmem>>, vector<2x2xf32>
    %48 = vector.extract_strided_slice %46 {offsets = [0, 0], sizes = [2, 1], strides = [1, 1]} : vector<2x2xf32> to vector<2x1xf32>
    %49 = vector.broadcast %48 : vector<2x1xf32> to vector<2x8xf32>
    %50 = arith.mulf %49, %42 : vector<2x8xf32>
    %51 = vector.extract_strided_slice %46 {offsets = [0, 1], sizes = [2, 1], strides = [1, 1]} : vector<2x2xf32> to vector<2x1xf32>
    %52 = vector.broadcast %51 : vector<2x1xf32> to vector<2x8xf32>
    %53 = arith.mulf %52, %45 : vector<2x8xf32>
    %54 = arith.addf %50, %53 : vector<2x8xf32>
    %55 = arith.addf %54, %29 : vector<2x8xf32>
    %56 = math.tanh %55 : vector<2x8xf32>
    %57 = arith.mulf %56, %17 : vector<2x8xf32>
    %58 = arith.addf %57, %20 : vector<2x8xf32>
    %59 = vector.extract_strided_slice %58 {offsets = [0, 0], sizes = [2, 2], strides = [1, 1]} : vector<2x8xf32> to vector<2x2xf32>
    %60 = vector.extract_strided_slice %58 {offsets = [0, 2], sizes = [2, 2], strides = [1, 1]} : vector<2x8xf32> to vector<2x2xf32>
    %61 = vector.extract_strided_slice %58 {offsets = [0, 4], sizes = [2, 2], strides = [1, 1]} : vector<2x8xf32> to vector<2x2xf32>
    %62 = vector.extract_strided_slice %58 {offsets = [0, 6], sizes = [2, 2], strides = [1, 1]} : vector<2x8xf32> to vector<2x2xf32>
    %63 = arith.mulf %60, %47 : vector<2x2xf32>
    %64 = arith.mulf %59, %61 : vector<2x2xf32>
    %65 = arith.addf %63, %64 : vector<2x2xf32>
    %66 = math.tanh %65 : vector<2x2xf32>
    %67 = arith.mulf %62, %66 : vector<2x2xf32>
    %68 = vector.extract_strided_slice %67 {offsets = [0, 0], sizes = [2, 1], strides = [1, 1]} : vector<2x2xf32> to vector<2x1xf32>
    %69 = vector.broadcast %68 : vector<2x1xf32> to vector<2x8xf32>
    %70 = arith.mulf %69, %42 : vector<2x8xf32>
    %71 = vector.extract_strided_slice %67 {offsets = [0, 1], sizes = [2, 1], strides = [1, 1]} : vector<2x2xf32> to vector<2x1xf32>
    %72 = vector.broadcast %71 : vector<2x1xf32> to vector<2x8xf32>
    %73 = arith.mulf %72, %45 : vector<2x8xf32>
    %74 = arith.addf %70, %73 : vector<2x8xf32>
    %75 = arith.addf %74, %30 : vector<2x8xf32>
    %76 = math.tanh %75 : vector<2x8xf32>
    %77 = arith.mulf %76, %17 : vector<2x8xf32>
    %78 = arith.addf %77, %20 : vector<2x8xf32>
    %79 = vector.extract_strided_slice %78 {offsets = [0, 0], sizes = [2, 2], strides = [1, 1]} : vector<2x8xf32> to vector<2x2xf32>
    %80 = vector.extract_strided_slice %78 {offsets = [0, 2], sizes = [2, 2], strides = [1, 1]} : vector<2x8xf32> to vector<2x2xf32>
    %81 = vector.extract_strided_slice %78 {offsets = [0, 4], sizes = [2, 2], strides = [1, 1]} : vector<2x8xf32> to vector<2x2xf32>
    %82 = vector.extract_strided_slice %78 {offsets = [0, 6], sizes = [2, 2], strides = [1, 1]} : vector<2x8xf32> to vector<2x2xf32>
    %83 = arith.mulf %80, %65 : vector<2x2xf32>
    %84 = arith.mulf %79, %81 : vector<2x2xf32>
    %85 = arith.addf %83, %84 : vector<2x2xf32>
    %86 = math.tanh %85 : vector<2x2xf32>
    %87 = arith.mulf %82, %86 : vector<2x2xf32>
    %88 = vector.extract_strided_slice %87 {offsets = [0, 0], sizes = [2, 1], strides = [1, 1]} : vector<2x2xf32> to vector<2x1xf32>
    %89 = vector.broadcast %88 : vector<2x1xf32> to vector<2x8xf32>
    %90 = arith.mulf %89, %42 : vector<2x8xf32>
    %91 = vector.extract_strided_slice %87 {offsets = [0, 1], sizes = [2, 1], strides = [1, 1]} : vector<2x2xf32> to vector<2x1xf32>
    %92 = vector.broadcast %91 : vector<2x1xf32> to vector<2x8xf32>
    %93 = arith.mulf %92, %45 : vector<2x8xf32>
    %94 = arith.addf %90, %93 : vector<2x8xf32>
    %95 = arith.addf %94, %31 : vector<2x8xf32>
    %96 = math.tanh %95 : vector<2x8xf32>
    %97 = arith.mulf %96, %17 : vector<2x8xf32>
    %98 = arith.addf %97, %20 : vector<2x8xf32>
    %99 = vector.extract_strided_slice %98 {offsets = [0, 0], sizes = [2, 2], strides = [1, 1]} : vector<2x8xf32> to vector<2x2xf32>
    %100 = vector.extract_strided_slice %98 {offsets = [0, 2], sizes = [2, 2], strides = [1, 1]} : vector<2x8xf32> to vector<2x2xf32>
    %101 = vector.extract_strided_slice %98 {offsets = [0, 4], sizes = [2, 2], strides = [1, 1]} : vector<2x8xf32> to vector<2x2xf32>
    %102 = vector.extract_strided_slice %98 {offsets = [0, 6], sizes = [2, 2], strides = [1, 1]} : vector<2x8xf32> to vector<2x2xf32>
    %103 = arith.mulf %100, %85 : vector<2x2xf32>
    %104 = arith.mulf %99, %101 : vector<2x2xf32>
    %105 = arith.addf %103, %104 : vector<2x2xf32>
    %106 = math.tanh %105 : vector<2x2xf32>
    %107 = arith.mulf %102, %106 : vector<2x2xf32>
    %108 = vector.extract_strided_slice %107 {offsets = [0, 0], sizes = [2, 1], strides = [1, 1]} : vector<2x2xf32> to vector<2x1xf32>
    %109 = vector.broadcast %108 : vector<2x1xf32> to vector<2x8xf32>
    %110 = arith.mulf %109, %42 : vector<2x8xf32>
    %111 = vector.extract_strided_slice %107 {offsets = [0, 1], sizes = [2, 1], strides = [1, 1]} : vector<2x2xf32> to vector<2x1xf32>
    %112 = vector.broadcast %111 : vector<2x1xf32> to vector<2x8xf32>
    %113 = arith.mulf %112, %45 : vector<2x8xf32>
    %114 = arith.addf %110, %113 : vector<2x8xf32>
    %115 = arith.addf %114, %32 : vector<2x8xf32>
    %116 = math.tanh %115 : vector<2x8xf32>
    %117 = arith.mulf %116, %17 : vector<2x8xf32>
    %118 = arith.addf %117, %20 : vector<2x8xf32>
    %119 = vector.extract_strided_slice %118 {offsets = [0, 0], sizes = [2, 2], strides = [1, 1]} : vector<2x8xf32> to vector<2x2xf32>
    %120 = vector.extract_strided_slice %118 {offsets = [0, 2], sizes = [2, 2], strides = [1, 1]} : vector<2x8xf32> to vector<2x2xf32>
    %121 = vector.extract_strided_slice %118 {offsets = [0, 4], sizes = [2, 2], strides = [1, 1]} : vector<2x8xf32> to vector<2x2xf32>
    %122 = vector.extract_strided_slice %118 {offsets = [0, 6], sizes = [2, 2], strides = [1, 1]} : vector<2x8xf32> to vector<2x2xf32>
    %123 = arith.mulf %120, %105 : vector<2x2xf32>
    %124 = arith.mulf %119, %121 : vector<2x2xf32>
    %125 = arith.addf %123, %124 : vector<2x2xf32>
    %126 = math.tanh %125 : vector<2x2xf32>
    %127 = arith.mulf %122, %126 : vector<2x2xf32>
    %128 = vector.extract_strided_slice %127 {offsets = [0, 0], sizes = [2, 1], strides = [1, 1]} : vector<2x2xf32> to vector<2x1xf32>
    %129 = vector.broadcast %128 : vector<2x1xf32> to vector<2x8xf32>
    %130 = arith.mulf %129, %42 : vector<2x8xf32>
    %131 = vector.extract_strided_slice %127 {offsets = [0, 1], sizes = [2, 1], strides = [1, 1]} : vector<2x2xf32> to vector<2x1xf32>
    %132 = vector.broadcast %131 : vector<2x1xf32> to vector<2x8xf32>
    %133 = arith.mulf %132, %45 : vector<2x8xf32>
    %134 = arith.addf %130, %133 : vector<2x8xf32>
    %135 = arith.addf %134, %33 : vector<2x8xf32>
    %136 = math.tanh %135 : vector<2x8xf32>
    %137 = arith.mulf %136, %17 : vector<2x8xf32>
    %138 = arith.addf %137, %20 : vector<2x8xf32>
    %139 = vector.extract_strided_slice %138 {offsets = [0, 0], sizes = [2, 2], strides = [1, 1]} : vector<2x8xf32> to vector<2x2xf32>
    %140 = vector.extract_strided_slice %138 {offsets = [0, 2], sizes = [2, 2], strides = [1, 1]} : vector<2x8xf32> to vector<2x2xf32>
    %141 = vector.extract_strided_slice %138 {offsets = [0, 4], sizes = [2, 2], strides = [1, 1]} : vector<2x8xf32> to vector<2x2xf32>
    %142 = vector.extract_strided_slice %138 {offsets = [0, 6], sizes = [2, 2], strides = [1, 1]} : vector<2x8xf32> to vector<2x2xf32>
    %143 = arith.mulf %140, %125 : vector<2x2xf32>
    %144 = arith.mulf %139, %141 : vector<2x2xf32>
    %145 = arith.addf %143, %144 : vector<2x2xf32>
    %146 = math.tanh %145 : vector<2x2xf32>
    %147 = arith.mulf %142, %146 : vector<2x2xf32>
    %148 = vector.extract_strided_slice %147 {offsets = [0, 0], sizes = [2, 1], strides = [1, 1]} : vector<2x2xf32> to vector<2x1xf32>
    %149 = vector.broadcast %148 : vector<2x1xf32> to vector<2x8xf32>
    %150 = arith.mulf %149, %42 : vector<2x8xf32>
    %151 = vector.extract_strided_slice %147 {offsets = [0, 1], sizes = [2, 1], strides = [1, 1]} : vector<2x2xf32> to vector<2x1xf32>
    %152 = vector.broadcast %151 : vector<2x1xf32> to vector<2x8xf32>
    %153 = arith.mulf %152, %45 : vector<2x8xf32>
    %154 = arith.addf %150, %153 : vector<2x8xf32>
    %155 = arith.addf %154, %34 : vector<2x8xf32>
    %156 = math.tanh %155 : vector<2x8xf32>
    %157 = arith.mulf %156, %17 : vector<2x8xf32>
    %158 = arith.addf %157, %20 : vector<2x8xf32>
    %159 = vector.extract_strided_slice %158 {offsets = [0, 0], sizes = [2, 2], strides = [1, 1]} : vector<2x8xf32> to vector<2x2xf32>
    %160 = vector.extract_strided_slice %158 {offsets = [0, 2], sizes = [2, 2], strides = [1, 1]} : vector<2x8xf32> to vector<2x2xf32>
    %161 = vector.extract_strided_slice %158 {offsets = [0, 4], sizes = [2, 2], strides = [1, 1]} : vector<2x8xf32> to vector<2x2xf32>
    %162 = vector.extract_strided_slice %158 {offsets = [0, 6], sizes = [2, 2], strides = [1, 1]} : vector<2x8xf32> to vector<2x2xf32>
    %163 = arith.mulf %160, %145 : vector<2x2xf32>
    %164 = arith.mulf %159, %161 : vector<2x2xf32>
    %165 = arith.addf %163, %164 : vector<2x2xf32>
    %166 = math.tanh %165 : vector<2x2xf32>
    %167 = arith.mulf %162, %166 : vector<2x2xf32>
    %168 = vector.extract_strided_slice %167 {offsets = [0, 0], sizes = [2, 1], strides = [1, 1]} : vector<2x2xf32> to vector<2x1xf32>
    %169 = vector.broadcast %168 : vector<2x1xf32> to vector<2x8xf32>
    %170 = arith.mulf %169, %42 : vector<2x8xf32>
    %171 = vector.extract_strided_slice %167 {offsets = [0, 1], sizes = [2, 1], strides = [1, 1]} : vector<2x2xf32> to vector<2x1xf32>
    %172 = vector.broadcast %171 : vector<2x1xf32> to vector<2x8xf32>
    %173 = arith.mulf %172, %45 : vector<2x8xf32>
    %174 = arith.addf %170, %173 : vector<2x8xf32>
    %175 = arith.addf %174, %35 : vector<2x8xf32>
    %176 = math.tanh %175 : vector<2x8xf32>
    %177 = arith.mulf %176, %17 : vector<2x8xf32>
    %178 = arith.addf %177, %20 : vector<2x8xf32>
    %179 = vector.extract_strided_slice %178 {offsets = [0, 0], sizes = [2, 2], strides = [1, 1]} : vector<2x8xf32> to vector<2x2xf32>
    %180 = vector.extract_strided_slice %178 {offsets = [0, 2], sizes = [2, 2], strides = [1, 1]} : vector<2x8xf32> to vector<2x2xf32>
    %181 = vector.extract_strided_slice %178 {offsets = [0, 4], sizes = [2, 2], strides = [1, 1]} : vector<2x8xf32> to vector<2x2xf32>
    %182 = vector.extract_strided_slice %178 {offsets = [0, 6], sizes = [2, 2], strides = [1, 1]} : vector<2x8xf32> to vector<2x2xf32>
    %183 = arith.mulf %180, %165 : vector<2x2xf32>
    %184 = arith.mulf %179, %181 : vector<2x2xf32>
    %185 = arith.addf %183, %184 : vector<2x2xf32>
    %186 = math.tanh %185 : vector<2x2xf32>
    %187 = arith.mulf %182, %186 : vector<2x2xf32>
    %188 = vector.extract_strided_slice %187 {offsets = [0, 0], sizes = [2, 1], strides = [1, 1]} : vector<2x2xf32> to vector<2x1xf32>
    %189 = vector.broadcast %188 : vector<2x1xf32> to vector<2x8xf32>
    %190 = arith.mulf %189, %42 : vector<2x8xf32>
    %191 = vector.extract_strided_slice %187 {offsets = [0, 1], sizes = [2, 1], strides = [1, 1]} : vector<2x2xf32> to vector<2x1xf32>
    %192 = vector.broadcast %191 : vector<2x1xf32> to vector<2x8xf32>
    %193 = arith.mulf %192, %45 : vector<2x8xf32>
    %194 = arith.addf %190, %193 : vector<2x8xf32>
    %195 = arith.addf %194, %36 : vector<2x8xf32>
    %196 = math.tanh %195 : vector<2x8xf32>
    %197 = arith.mulf %196, %17 : vector<2x8xf32>
    %198 = arith.addf %197, %20 : vector<2x8xf32>
    %199 = vector.extract_strided_slice %198 {offsets = [0, 0], sizes = [2, 2], strides = [1, 1]} : vector<2x8xf32> to vector<2x2xf32>
    %200 = vector.extract_strided_slice %198 {offsets = [0, 2], sizes = [2, 2], strides = [1, 1]} : vector<2x8xf32> to vector<2x2xf32>
    %201 = vector.extract_strided_slice %198 {offsets = [0, 4], sizes = [2, 2], strides = [1, 1]} : vector<2x8xf32> to vector<2x2xf32>
    %202 = vector.extract_strided_slice %198 {offsets = [0, 6], sizes = [2, 2], strides = [1, 1]} : vector<2x8xf32> to vector<2x2xf32>
    %203 = arith.mulf %200, %185 : vector<2x2xf32>
    %204 = arith.mulf %199, %201 : vector<2x2xf32>
    %205 = arith.addf %203, %204 : vector<2x2xf32>
    %206 = math.tanh %205 : vector<2x2xf32>
    %207 = arith.mulf %202, %206 : vector<2x2xf32>
    %208 = tpu.concatenate %67, %87, %107, %127, %147, %167, %187, %207 in 1 : vector<2x2xf32>, vector<2x2xf32>, vector<2x2xf32>, vector<2x2xf32>, vector<2x2xf32>, vector<2x2xf32>, vector<2x2xf32>, vector<2x2xf32> -> vector<2x16xf32>
    %c0_19 = arith.constant 0 : index
    %c0_20 = arith.constant 0 : index
    %209 = vector.load %arg6[%c0_19, %c0_20] : memref<2x16xf32, #tpu.memory_space<vmem>>, vector<2x16xf32>
    tpu.vector_store %arg6[%c0_19, %c0_20], %208 {strides = array<i32>} : memref<2x16xf32, #tpu.memory_space<vmem>>, vector<2x16xf32>,
    return
  }
}

</mosaic_0001>

<llo_original>
// kernel: lstm_forward_pallas.1
$region0: #{lstm_forward_pallas.1}
  #allocation0 [shape = 'u32[]', space=smem, size = 0x4, offset = 0x4, fixed_abs, tag = 'smem constant byte address 0x4 - core index']
  #allocation1 [shape = 'u32[144,128]{1,0:T(1,128)}', space=vmem, size = 0x12000, scoped, tag = 'internal scratch']
  %s0 = inlined_call_operand.vmem [shape: f32[16,12], index: 0, kind: input, shape index: {}]
  %s1 = inlined_call_operand.vmem [shape: f32[12,8], index: 1, kind: input, shape index: {}]
  %s2 = inlined_call_operand.vmem [shape: f32[1,8], index: 2, kind: input, shape index: {}]
  %s3 = inlined_call_operand.vmem [shape: f32[2,8], index: 3, kind: input, shape index: {}]
  %s4 = inlined_call_operand.vmem [shape: f32[2,2], index: 4, kind: input, shape index: {}]
  %s5 = inlined_call_operand.vmem [shape: f32[2,2], index: 5, kind: input, shape index: {}]
  %s6 = inlined_call_operand.vmem [shape: f32[2,16], index: 6, kind: output, shape index: {}]
  %s7 = sld [smem:[#allocation0]]
  $region34: #{lstm_forward_pallas.1} parent=0
    _
  %s9 = ssub.s32 1, %s7
  %s10 = scalar_select 0, %s9, %s7
  // Predicated region
  $region2: #{lstm_forward_pallas.1} parent=0 // pred_check
    _
  $region3: #{lstm_forward_pallas.1} parent=0 // pred_check_branch
    %12 = sbr.rel (0) target = $region5
  $region4: #{lstm_forward_pallas.1} parent=0 // pred_region
    _
  $region5: #{lstm_forward_pallas.1} parent=0 // pred_fallthru
    _
  // Predicated region
  $region6: #{lstm_forward_pallas.1} parent=0 // pred_check
    _
  $region7: #{lstm_forward_pallas.1} parent=0 // pred_check_branch
    %14 = sbr.rel (0) target = $region9
  $region8: #{lstm_forward_pallas.1} parent=0 // pred_region
    _
  $region9: #{lstm_forward_pallas.1} parent=0 // pred_fallthru
    _
  // Predicated region
  $region10: #{lstm_forward_pallas.1} parent=0 // pred_check
    _
  $region11: #{lstm_forward_pallas.1} parent=0 // pred_check_branch
    %16 = sbr.rel (0) target = $region13
  $region12: #{lstm_forward_pallas.1} parent=0 // pred_region
    _
  $region13: #{lstm_forward_pallas.1} parent=0 // pred_fallthru
    _
  // Predicated region
  $region14: #{lstm_forward_pallas.1} parent=0 // pred_check
    _
  $region15: #{lstm_forward_pallas.1} parent=0 // pred_check_branch
    %18 = sbr.rel (0) target = $region17
  $region16: #{lstm_forward_pallas.1} parent=0 // pred_region
    _
  $region17: #{lstm_forward_pallas.1} parent=0 // pred_fallthru
    _
  // Predicated region
  $region18: #{lstm_forward_pallas.1} parent=0 // pred_check
    _
  $region19: #{lstm_forward_pallas.1} parent=0 // pred_check_branch
    %20 = sbr.rel (0) target = $region21
  $region20: #{lstm_forward_pallas.1} parent=0 // pred_region
    _
  $region21: #{lstm_forward_pallas.1} parent=0 // pred_fallthru
    _
  // Predicated region
  $region22: #{lstm_forward_pallas.1} parent=0 // pred_check
    _
  $region23: #{lstm_forward_pallas.1} parent=0 // pred_check_branch
    %22 = sbr.rel (0) target = $region25
  $region24: #{lstm_forward_pallas.1} parent=0 // pred_region
    _
  $region25: #{lstm_forward_pallas.1} parent=0 // pred_fallthru
    _
  %v23 = vlaneseq
  %v24 = vand.u32 %v23, 127
  %vm25 = vcmp.ge.s32.totalorder %v24, 4
  %vm26 = vcmp.lt.s32.totalorder %v24, 6
  %vm27 = vmand %vm25, %vm26
  %v28 = vsel %vm27, 1.0, 0.5
  %v29 = vsel %vm27, 0.0, 0.5
  %v30 = vld [vmem:[%s0] sm:$0xff]
  %v31 = vld [vmem:[%s0 + $0x8] sm:$0xff]
  %v32 = vld [vmem:[%s1] sm:$0xff]
  %v33 = vld [vmem:[%s1 + $0x8] sm:$0xf]
  %v34 = vld [vmem:[%s2] sm:$0x1]
  %v36 = vlaneseq
  %v37 = vshrl.u32 %v36, 7
  %v38 = vsub.s32 0, %v37
  %v39 = vrot.slane %v34, %v38
  %vm41 = vcmask 97280
  %v43 = vsel %vm41, %v30, 0
  %v46 = vsel %vm41, %v31, 0
  %vm48 = vcmask 1043456
  %v50 = vsel %vm48, %v33, 0
  %52 = vmatprep.subr.mxu0 0.0
  %53 = vmatpush1.msra.mxu0 0.0
  %54 = vmatprep.subr.mxu0 0.0
  %55 = vmatpush1.msra.mxu0 0.0
  %56 = vmatprep.subr.mxu0 0.0
  %57 = vmatpush1.msra.mxu0 0.0
  %58 = vmatprep.subr.mxu0 0.0
  %59 = vmatpush1.msra.mxu0 0.0
  %60 = vmatprep.subr.mxu0 0.0
  %61 = vmatpush1.msra.mxu0 0.0
  %62 = vmatprep.subr.mxu0 0.0
  %63 = vmatpush1.msra.mxu0 0.0
  %64 = vmatprep.subr.mxu0 0.0
  %65 = vmatpush1.msra.mxu0 0.0
  %66 = vmatprep.subr.mxu0 0.0
  %67 = vmatpush1.msra.mxu0 0.0
  %68 = vmatprep.subr.mxu0 0.0
  %69 = vmatpush1.msra.mxu0 0.0
  %70 = vmatprep.subr.mxu0 0.0
  %71 = vmatpush1.msra.mxu0 0.0
  %72 = vmatprep.subr.mxu0 0.0
  %73 = vmatpush1.msra.mxu0 0.0
  %74 = vmatprep.subr.mxu0 0.0
  %75 = vmatpush1.msra.mxu0 0.0
  %76 = vmatprep.subr.mxu0 0.0
  %77 = vmatpush1.msra.mxu0 0.0
  %78 = vmatprep.subr.mxu0 0.0
  %79 = vmatpush1.msra.mxu0 0.0
  %80 = vmatprep.subr.mxu0 0.0
  %81 = vmatpush1.msra.mxu0 %v50
  %82 = vmatprep.subr.mxu0 0.0
  %83 = vmatpush1.msra.mxu0 %v32
  %84 = vmatprep.subr.mxu0 0.0
  %85 = vmatpush2.msra.mxu0 0.0
  %86 = vmatprep.subr.mxu0 0.0
  %87 = vmatpush2.msra.mxu0 0.0
  %88 = vmatprep.subr.mxu0 0.0
  %89 = vmatpush2.msra.mxu0 0.0
  %90 = vmatprep.subr.mxu0 0.0
  %91 = vmatpush2.msra.mxu0 0.0
  %92 = vmatprep.subr.mxu0 0.0
  %93 = vmatpush2.msra.mxu0 0.0
  %94 = vmatprep.subr.mxu0 0.0
  %95 = vmatpush2.msra.mxu0 0.0
  %96 = vmatprep.subr.mxu0 0.0
  %97 = vmatpush2.msra.mxu0 0.0
  %98 = vmatprep.subr.mxu0 0.0
  %99 = vmatpush2.msra.mxu0 0.0
  %100 = vmatprep.subr.mxu0 0.0
  %101 = vmatpush2.msra.mxu0 0.0
  %102 = vmatprep.subr.mxu0 0.0
  %103 = vmatpush2.msra.mxu0 0.0
  %104 = vmatprep.subr.mxu0 0.0
  %105 = vmatpush2.msra.mxu0 0.0
  %106 = vmatprep.subr.mxu0 0.0
  %107 = vmatpush2.msra.mxu0 0.0
  %108 = vmatprep.subr.mxu0 0.0
  %109 = vmatpush2.msra.mxu0 0.0
  %110 = vmatprep.subr.mxu0 0.0
  %111 = vmatpush2.msra.mxu0 0.0
  %112 = vmatprep.subr.mxu0 0.0
  %113 = vmatpush2.msra.mxu0 0.0
  %114 = vmatprep.subr.mxu0 0.0
  %115 = vmatpush2.msra.mxu0 0.0
  %116 = vmatprep.mubr.f32.mxu0 0.0
  %117 = vmatmul.mubr.f32.gmra.mxu0 %v43
  %v118 = vpop.f32.mrf.mxu0
  %v119 = vadd.f32 %v39, %v118
  %v120 = vpop.f32.mrf.mxu0
  %121 = vmatprep.mubr.f32.mxu0 0.0
  %122 = vmatmul.mubr.f32.gmra.mxu0 %v46
  %v123 = vpop.f32.mrf.mxu0
  %v124 = vadd.f32 %v39, %v123
  %v125 = vpop.f32.mrf.mxu0
  %126 = vdwg.mxu0
  %v127 = vmul.f32 %v119, %v28
  %v128 = vmul.f32 %v124, %v28
  %v129 = vld [vmem:[%s3] sm:$0x3]
  %v130 = vmul.f32 %v129, %v28
  %v131 = vlaneseq
  %v132 = vshrl.u32 %v131, 7
  %v133 = vsub.s32 0, %v132
  %v134 = vrot.slane %v130, %v133
  %v135 = vlaneseq
  %v136 = vshrl.u32 %v135, 7
  %v137 = vsub.s32 1, %v136
  %v138 = vrot.slane %v130, %v137
  %v139 = vld [vmem:[%s4] sm:$0x3]
  %v140 = vld [vmem:[%s5] sm:$0x3]
  %142 = vset.pattern.permute.xlu0 0
  %143 = vperm.xlu0 %142, %v139
  %v144 = vpop.permute.xlu0 %143
  %v146 = vmul.f32 %v144, %v134
  %147 = vset.pattern.permute.xlu0 1
  %148 = vperm.xlu0 %147, %v139
  %v149 = vpop.permute.xlu0 %148
  %v151 = vmul.f32 %v149, %v138
  %v152 = vadd.f32 %v146, %v151
  %v153 = vadd.f32 %v152, %v127
  %v154 = vtanh.pop %v153
  %v155 = vmul.f32 %v154, %v28
  %v156 = vadd.f32 %v155, %v29
  %158 = vrot.lane.b32.xlu0 %v140, 2
  %v159 = vpop.permute.xlu0 %158
  %v161 = vmul.f32 %v156, %v159
  %163 = vrot.lane.b32.xlu0 %v156, 124
  %v164 = vpop.permute.xlu0 %163
  %v166 = vmul.f32 %v156, %v164
  %168 = vrot.lane.b32.xlu0 %v166, 2
  %v169 = vpop.permute.xlu0 %168
  %v171 = vadd.f32 %v161, %v169
  %v172 = vtanh.pop %v171
  %174 = vrot.lane.b32.xlu0 %v172, 4
  %v175 = vpop.permute.xlu0 %174
  %v177 = vmul.f32 %v156, %v175
  %179 = vset.pattern.permute.xlu0 6
  %180 = vperm.xlu0 %179, %v177
  %v181 = vpop.permute.xlu0 %180
  %v183 = vmul.f32 %v181, %v134
  %184 = vset.pattern.permute.xlu0 7
  %185 = vperm.xlu0 %184, %v177
  %v186 = vpop.permute.xlu0 %185
  %v188 = vmul.f32 %v186, %v138
  %v189 = vadd.f32 %v183, %v188
  %v191 = vrot.slane %v127, 2
  %v193 = vadd.f32 %v189, %v191
  %v194 = vtanh.pop %v193
  %v195 = vmul.f32 %v194, %v28
  %v196 = vadd.f32 %v195, %v29
  %v197 = vmul.f32 %v196, %v171
  %199 = vrot.lane.b32.xlu0 %v196, 124
  %v200 = vpop.permute.xlu0 %199
  %v202 = vmul.f32 %v196, %v200
  %204 = vrot.lane.b32.xlu0 %v202, 2
  %v205 = vpop.permute.xlu0 %204
  %v207 = vadd.f32 %v197, %v205
  %v208 = vtanh.pop %v207
  %210 = vrot.lane.b32.xlu0 %v208, 4
  %v211 = vpop.permute.xlu0 %210
  %v213 = vmul.f32 %v196, %v211
  %215 = vset.pattern.permute.xlu0 6
  %216 = vperm.xlu0 %215, %v213
  %v217 = vpop.permute.xlu0 %216
  %v219 = vmul.f32 %v217, %v134
  %220 = vset.pattern.permute.xlu0 7
  %221 = vperm.xlu0 %220, %v213
  %v222 = vpop.permute.xlu0 %221
  %v224 = vmul.f32 %v222, %v138
  %v225 = vadd.f32 %v219, %v224
  %v226 = vrot.slane %v127, 4
  %v228 = vadd.f32 %v225, %v226
  %v229 = vtanh.pop %v228
  %v230 = vmul.f32 %v229, %v28
  %v231 = vadd.f32 %v230, %v29
  %v232 = vmul.f32 %v231, %v207
  %234 = vrot.lane.b32.xlu0 %v231, 124
  %v235 = vpop.permute.xlu0 %234
  %v237 = vmul.f32 %v231, %v235
  %239 = vrot.lane.b32.xlu0 %v237, 2
  %v240 = vpop.permute.xlu0 %239
  %v242 = vadd.f32 %v232, %v240
  %v243 = vtanh.pop %v242
  %245 = vrot.lane.b32.xlu0 %v243, 4
  %v246 = vpop.permute.xlu0 %245
  %v248 = vmul.f32 %v231, %v246
  %250 = vset.pattern.permute.xlu0 6
  %251 = vperm.xlu0 %250, %v248
  %v252 = vpop.permute.xlu0 %251
  %v254 = vmul.f32 %v252, %v134
  %255 = vset.pattern.permute.xlu0 7
  %256 = vperm.xlu0 %255, %v248
  %v257 = vpop.permute.xlu0 %256
  %v259 = vmul.f32 %v257, %v138
  %v260 = vadd.f32 %v254, %v259
  %v261 = vrot.slane %v127, 6
  %v263 = vadd.f32 %v260, %v261
  %v264 = vtanh.pop %v263
  %v265 = vmul.f32 %v264, %v28
  %v266 = vadd.f32 %v265, %v29
  %v267 = vmul.f32 %v266, %v242
  %269 = vrot.lane.b32.xlu0 %v266, 124
  %v270 = vpop.permute.xlu0 %269
  %v272 = vmul.f32 %v266, %v270
  %274 = vrot.lane.b32.xlu0 %v272, 2
  %v275 = vpop.permute.xlu0 %274
  %v277 = vadd.f32 %v267, %v275
  %v278 = vtanh.pop %v277
  %280 = vrot.lane.b32.xlu0 %v278, 4
  %v281 = vpop.permute.xlu0 %280
  %v283 = vmul.f32 %v266, %v281
  %285 = vset.pattern.permute.xlu0 6
  %286 = vperm.xlu0 %285, %v283
  %v287 = vpop.permute.xlu0 %286
  %v289 = vmul.f32 %v287, %v134
  %290 = vset.pattern.permute.xlu0 7
  %291 = vperm.xlu0 %290, %v283
  %v292 = vpop.permute.xlu0 %291
  %v294 = vmul.f32 %v292, %v138
  %v295 = vadd.f32 %v289, %v294
  %v296 = vadd.f32 %v295, %v128
  %v297 = vtanh.pop %v296
  %v298 = vmul.f32 %v297, %v28
  %v299 = vadd.f32 %v298, %v29
  %v300 = vmul.f32 %v299, %v277
  %302 = vrot.lane.b32.xlu0 %v299, 124
  %v303 = vpop.permute.xlu0 %302
  %v305 = vmul.f32 %v299, %v303
  %307 = vrot.lane.b32.xlu0 %v305, 2
  %v308 = vpop.permute.xlu0 %307
  %v310 = vadd.f32 %v300, %v308
  %v311 = vtanh.pop %v310
  %313 = vrot.lane.b32.xlu0 %v311, 4
  %v314 = vpop.permute.xlu0 %313
  %v316 = vmul.f32 %v299, %v314
  %318 = vset.pattern.permute.xlu0 6
  %319 = vperm.xlu0 %318, %v316
  %v320 = vpop.permute.xlu0 %319
  %v322 = vmul.f32 %v320, %v134
  %323 = vset.pattern.permute.xlu0 7
  %324 = vperm.xlu0 %323, %v316
  %v325 = vpop.permute.xlu0 %324
  %v327 = vmul.f32 %v325, %v138
  %v328 = vadd.f32 %v322, %v327
  %v330 = vrot.slane %v128, 2
  %v332 = vadd.f32 %v328, %v330
  %v333 = vtanh.pop %v332
  %v334 = vmul.f32 %v333, %v28
  %v335 = vadd.f32 %v334, %v29
  %v336 = vmul.f32 %v335, %v310
  %338 = vrot.lane.b32.xlu0 %v335, 124
  %v339 = vpop.permute.xlu0 %338
  %v341 = vmul.f32 %v335, %v339
  %343 = vrot.lane.b32.xlu0 %v341, 2
  %v344 = vpop.permute.xlu0 %343
  %v346 = vadd.f32 %v336, %v344
  %v347 = vtanh.pop %v346
  %349 = vrot.lane.b32.xlu0 %v347, 4
  %v350 = vpop.permute.xlu0 %349
  %v352 = vmul.f32 %v335, %v350
  %354 = vset.pattern.permute.xlu0 6
  %355 = vperm.xlu0 %354, %v352
  %v356 = vpop.permute.xlu0 %355
  %v358 = vmul.f32 %v356, %v134
  %359 = vset.pattern.permute.xlu0 7
  %360 = vperm.xlu0 %359, %v352
  %v361 = vpop.permute.xlu0 %360
  %v363 = vmul.f32 %v361, %v138
  %v364 = vadd.f32 %v358, %v363
  %v365 = vrot.slane %v128, 4
  %v367 = vadd.f32 %v364, %v365
  %v368 = vtanh.pop %v367
  %v369 = vmul.f32 %v368, %v28
  %v370 = vadd.f32 %v369, %v29
  %v371 = vmul.f32 %v370, %v346
  %373 = vrot.lane.b32.xlu0 %v370, 124
  %v374 = vpop.permute.xlu0 %373
  %v376 = vmul.f32 %v370, %v374
  %378 = vrot.lane.b32.xlu0 %v376, 2
  %v379 = vpop.permute.xlu0 %378
  %v381 = vadd.f32 %v371, %v379
  %v382 = vtanh.pop %v381
  %384 = vrot.lane.b32.xlu0 %v382, 4
  %v385 = vpop.permute.xlu0 %384
  %v387 = vmul.f32 %v370, %v385
  %389 = vset.pattern.permute.xlu0 6
  %390 = vperm.xlu0 %389, %v387
  %v391 = vpop.permute.xlu0 %390
  %v393 = vmul.f32 %v391, %v134
  %394 = vset.pattern.permute.xlu0 7
  %395 = vperm.xlu0 %394, %v387
  %v396 = vpop.permute.xlu0 %395
  %v398 = vmul.f32 %v396, %v138
  %v399 = vadd.f32 %v393, %v398
  %v400 = vrot.slane %v128, 6
  %v402 = vadd.f32 %v399, %v400
  %v403 = vtanh.pop %v402
  %v404 = vmul.f32 %v403, %v28
  %v405 = vadd.f32 %v404, %v29
  %v406 = vmul.f32 %v405, %v381
  %408 = vrot.lane.b32.xlu0 %v405, 124
  %v409 = vpop.permute.xlu0 %408
  %v411 = vmul.f32 %v405, %v409
  %413 = vrot.lane.b32.xlu0 %v411, 2
  %v414 = vpop.permute.xlu0 %413
  %v416 = vadd.f32 %v406, %v414
  %v417 = vtanh.pop %v416
  %419 = vrot.lane.b32.xlu0 %v417, 4
  %v420 = vpop.permute.xlu0 %419
  %v422 = vmul.f32 %v405, %v420
  %423 = vrot.lane.b32.xlu0 %v177, 122
  %v424 = vpop.permute.xlu0 %423
  %426 = vrot.lane.b32.xlu0 %v213, 124
  %v427 = vpop.permute.xlu0 %426
  %429 = vrot.lane.b32.xlu0 %v248, 126
  %v430 = vpop.permute.xlu0 %429
  %432 = vrot.lane.b32.xlu0 %v316, 2
  %v433 = vpop.permute.xlu0 %432
  %435 = vrot.lane.b32.xlu0 %v352, 4
  %v436 = vpop.permute.xlu0 %435
  %438 = vrot.lane.b32.xlu0 %v387, 6
  %v439 = vpop.permute.xlu0 %438
  %442 = vrot.lane.b32.xlu0 %v422, 8
  %v443 = vpop.permute.xlu0 %442
  %vm445 = vcmask 15360
  %v446 = vsel %vm445, %v424, %v427
  %vm447 = vcmask 31744
  %v448 = vsel %vm447, %v446, %v430
  %vm449 = vcmask 48128
  %v450 = vsel %vm449, %v448, %v283
  %vm451 = vcmask 64512
  %v452 = vsel %vm451, %v450, %v433
  %vm453 = vcmask 80896
  %v454 = vsel %vm453, %v452, %v436
  %v455 = vsel %vm41, %v454, %v439
  %vm456 = vcmask 113664
  %v457 = vsel %vm456, %v455, %v443
  %vm458 = vcmask 123904
  %459 = vst.msk [vmem:[%s6] sm:$0x3] %vm458, %v457
  // Predicated region
  $region26: #{lstm_forward_pallas.1} parent=0 // pred_check
    _
  $region27: #{lstm_forward_pallas.1} parent=0 // pred_check_branch
    %461 = sbr.rel (0) target = $region29
  $region28: #{lstm_forward_pallas.1} parent=0 // pred_region
    _
  $region29: #{lstm_forward_pallas.1} parent=0 // pred_fallthru
    _
  // Predicated region
  $region30: #{lstm_forward_pallas.1} parent=0 // pred_check
    _
  $region31: #{lstm_forward_pallas.1} parent=0 // pred_check_branch
    %463 = sbr.rel (0) target = $region33
  $region32: #{lstm_forward_pallas.1} parent=0 // pred_region
    _
  $region33: #{lstm_forward_pallas.1} parent=0 // pred_fallthru
    _

</llo_original>
